<compile_context>
chip_gen: v7x
topology: tpu7x:2x2x1
jax: 0.10.0
libtpu: 0.0.40
codegen_flags: <defaults>
</compile_context>

<pallas_src>
import functools

import numpy as np
import jax
import jax.numpy as jnp
from jax import lax
from jax.experimental import pallas as pl
from jax.experimental.pallas import tpu as pltpu


def _round_up(a, b):
    return ((a + b - 1) // b) * b


# ----------------------------------------------------------------------------
# Deterministic STFT analysis weights — mirrors init_kernels() from the PyTorch
# module (periodic hamming window, fftbins=True).
# ----------------------------------------------------------------------------
def init_stft_kernel(win_len, fft_len, win_type="hamming"):
    if win_type is None or win_type == "None":
        window = np.ones(win_len, dtype=np.float64)
    else:  # periodic hamming == scipy get_window('hamming', win_len, fftbins=True)
        n = np.arange(win_len)
        window = 0.54 - 0.46 * np.cos(2.0 * np.pi * n / win_len)
    N = fft_len
    fourier_basis = np.fft.rfft(np.eye(N))[:win_len]            # (win_len, N//2+1)
    real_kernel = np.real(fourier_basis)
    imag_kernel = np.imag(fourier_basis)
    kernel = np.concatenate([real_kernel, imag_kernel], 1).T    # (2*(N//2+1), win_len)
    kernel = kernel * window
    return kernel.astype(np.float32)


# ----------------------------------------------------------------------------
# Pallas kernel: one (dim, TILE_F) output tile per grid step.
# ----------------------------------------------------------------------------
def _conv_stft_kernel(xc_ref, wr_ref, wi_ref, mags_ref, phase_ref, *, r, tile_f):
    # xc_ref:  (1, win_inc, NC)    compute dtype — polyphase chunk slab (resident per b)
    # wr_ref:  (r, dim, win_inc)   compute dtype — real half of analysis weights
    # wi_ref:  (r, dim, win_inc)   compute dtype — imag half
    # mags_ref / phase_ref: (1, dim, tile_f) float32
    f0 = pl.multiple_of(pl.program_id(1) * tile_f, tile_f)
    # One lane-aligned slab load; the r frame shifts become cheap static lane slices.
    slab = xc_ref[0, :, pl.ds(f0, tile_f + r - 1)]              # (win_inc, tile_f+r-1)

    dn = (((1,), (0,)), ((), ()))                               # (dim,K) x (K,TILE_F)

    def mm(w, xs):
        return lax.dot_general(w, xs, dn, preferred_element_type=jnp.float32)

    x0 = slab[:, 0:tile_f]
    real = mm(wr_ref[0], x0)
    imag = mm(wi_ref[0], x0)
    for j in range(1, r):                                       # r is small and static
        xs = slab[:, j:j + tile_f]
        real = real + mm(wr_ref[j], xs)
        imag = imag + mm(wi_ref[j], xs)

    mags_ref[0] = jnp.sqrt(real * real + imag * imag)
    phase_ref[0] = jnp.arctan2(imag, real)
    # TODO(synk): feature_type='complex' branch (raw conv output) intentionally not emitted.


# ----------------------------------------------------------------------------
# Wrapper
# ----------------------------------------------------------------------------
def conv_stft(x, weight, win_len, win_inc, fft_len, *, tile_f=None,
              compute_dtype=jnp.bfloat16):
    """x: (B, T) float32. weight: (2*(fft_len//2+1), win_len) float32.
    Returns (mags, phase), each (B, fft_len//2+1, n_frames) float32."""
    B, T = x.shape
    C, W = weight.shape
    dim = fft_len // 2 + 1
    assert C == 2 * dim and W == win_len

    pad = win_len - win_inc
    Tp = T + 2 * pad
    n_frames = (Tp - win_len) // win_inc + 1
    r = -(-win_len // win_inc)              # ceil(win_len / win_inc)
    wk = r * win_inc                        # weight taps zero-padded to a chunk multiple

    # Frame-tile size: multiple of 128 (lane-dense stores), capped at 512 so the
    # double-buffered output blocks (2 * dim * tile_f * 4B each) + resident signal slab
    # fit comfortably in v7x's 64 MiB VMEM as well as v5e/v6e's 128 MiB.
    if tile_f is None:
        tile_f = min(512, _round_up(n_frames, 128))
    f_pad = _round_up(n_frames, tile_f)
    nc = _round_up(f_pad + r - 1, 128)      # chunks (lane dim of the polyphase slab)

    # Pad exactly like F.pad([pad, pad]), then extend/truncate to nc*win_inc samples.
    # Samples beyond the last frame never contribute to any output.
    xp = jnp.pad(x, ((0, 0), (pad, pad)))
    total = nc * win_inc
    if total >= Tp:
        xp = jnp.pad(xp, ((0, 0), (0, total - Tp)))
    else:
        xp = xp[:, :total]
    # Polyphase layout: xc[b, k, m] = xp[b, m*win_inc + k]   -> (B, win_inc, nc)
    xc = xp.reshape(B, nc, win_inc).transpose(0, 2, 1).astype(compute_dtype)

    # Weights: zero-pad taps to wk, split real/imag, reshape to (r, dim, win_inc).
    wpad = jnp.pad(weight, ((0, 0), (0, wk - win_len))).reshape(C, r, win_inc)
    w_real = jnp.transpose(wpad[:dim], (1, 0, 2)).astype(compute_dtype)
    w_imag = jnp.transpose(wpad[dim:], (1, 0, 2)).astype(compute_dtype)

    kernel = functools.partial(_conv_stft_kernel, r=r, tile_f=tile_f)

    mags, phase = pl.pallas_call(
        kernel,
        out_shape=(
            jax.ShapeDtypeStruct((B, dim, f_pad), jnp.float32),
            jax.ShapeDtypeStruct((B, dim, f_pad), jnp.float32),
        ),
        grid_spec=pltpu.PrefetchScalarGridSpec(
            num_scalar_prefetch=0,
            grid=(B, f_pad // tile_f),
            in_specs=[
                # Whole polyphase slab resident per batch element (re-DMA only when b changes).
                pl.BlockSpec((1, win_inc, nc), lambda b, ft: (b, 0, 0)),
                pl.BlockSpec((r, dim, win_inc), lambda b, ft: (0, 0, 0)),
                pl.BlockSpec((r, dim, win_inc), lambda b, ft: (0, 0, 0)),
            ],
            out_specs=[
                pl.BlockSpec((1, dim, tile_f), lambda b, ft: (b, 0, ft)),
                pl.BlockSpec((1, dim, tile_f), lambda b, ft: (b, 0, ft)),
            ],
        ),
        compiler_params=pltpu.CompilerParams(
            dimension_semantics=("parallel", "parallel"),
        ),
    )(xc, w_real, w_imag)

    return mags[:, :, :n_frames], phase[:, :, :n_frames]


# ----------------------------------------------------------------------------
# Plain-JAX reference (correctness check only)
# ----------------------------------------------------------------------------
def conv_stft_ref(x, weight, win_len, win_inc, fft_len):
    pad = win_len - win_inc
    xp = jnp.pad(x, ((0, 0), (pad, pad)))
    Tp = xp.shape[1]
    n_frames = (Tp - win_len) // win_inc + 1
    idx = jnp.arange(n_frames)[:, None] * win_inc + jnp.arange(win_len)[None, :]
    frames = xp[:, idx]                                         # (B, F, W)
    out = jnp.einsum("bfw,cw->bcf", frames, weight)             # (B, C, F)
    dim = fft_len // 2 + 1
    real, imag = out[:, :dim, :], out[:, dim:, :]
    return jnp.sqrt(real ** 2 + imag ** 2), jnp.arctan2(imag, real)


if __name__ == "__main__":
    # Small deterministic configuration consistent with the module.
    win_len = 16
    win_inc = 8
    fft_len = 16
    B, T = 2, 64

    weight_np = init_stft_kernel(win_len, fft_len, win_type="hamming")  # (18, 16)
    weight = jnp.asarray(weight_np)

    key = jax.random.PRNGKey(0)
    x = jax.random.normal(key, (B, T), dtype=jnp.float32)

    mags, phase = conv_stft(x, weight, win_len, win_inc, fft_len)
    jax.block_until_ready((mags, phase))

    # Reference computed on the same bf16-rounded inputs (the kernel's matmuls are bf16
    # with f32 accumulation); remaining differences are accumulation-order level.
    xb = x.astype(jnp.bfloat16).astype(jnp.float32)
    wb = weight.astype(jnp.bfloat16).astype(jnp.float32)
    mags_ref, phase_ref = conv_stft_ref(xb, wb, win_len, win_inc, fft_len)

    np.testing.assert_allclose(np.asarray(mags), np.asarray(mags_ref),
                               atol=2e-3, rtol=2e-3)
    # Wrap-aware phase comparison (avoids the +pi / -pi branch ambiguity).
    dphi = np.angle(np.exp(1j * (np.asarray(phase) - np.asarray(phase_ref))))
    np.testing.assert_allclose(dphi, np.zeros_like(dphi), atol=2e-2)

    print("KERNEL_OK")
</pallas_src>

<mosaic_0001>
module attributes {stable_mosaic.version = 11 : i64} {
  func.func @_conv_stft_kernel(%arg0: i32, %arg1: i32, %arg2: memref<1x8x256xbf16, #tpu.memory_space<vmem>>, %arg3: memref<2x9x8xbf16, #tpu.memory_space<vmem>>, %arg4: memref<2x9x8xbf16, #tpu.memory_space<vmem>>, %arg5: memref<1x9x128xf32, #tpu.memory_space<vmem>>, %arg6: memref<1x9x128xf32, #tpu.memory_space<vmem>>) attributes {dimension_semantics = [#tpu.dimension_semantics<parallel>, #tpu.dimension_semantics<parallel>], iteration_bounds = array<i64: 2, 1>, scalar_prefetch = 0 : i64, scratch_operands = 0 : i64, tpu.core_type = #tpu.core_type<tc>, window_params = [{transform_indices = @transform_0, window_bounds = array<i64: 1, 8, 256>}, {pipeline_mode = #tpu.pipeline_mode<synchronous>, transform_indices = @transform_1, window_bounds = array<i64: 2, 9, 8>}, {pipeline_mode = #tpu.pipeline_mode<synchronous>, transform_indices = @transform_2, window_bounds = array<i64: 2, 9, 8>}, {transform_indices = @transform_3, window_bounds = array<i64: 1, 9, 128>}, {transform_indices = @transform_4, window_bounds = array<i64: 1, 9, 128>}]} {
    %c128_i32 = arith.constant 128 : i32
    %0 = arith.muli %arg1, %c128_i32 : i32
    %1 = tpu.assume_multiple %0, 128 : i32
    %c0 = arith.constant 0 : index
    %c0_0 = arith.constant 0 : index
    %2 = arith.index_cast %1 : i32 to index
    %3 = vector.load %arg2[%c0, %c0_0, %2] : memref<1x8x256xbf16, #tpu.memory_space<vmem>>, vector<1x8x129xbf16>
    %4 = vector.shape_cast %3 : vector<1x8x129xbf16> to vector<8x129xbf16>
    %5 = vector.extract_strided_slice %4 {offsets = [0, 0], sizes = [8, 128], strides = [1, 1]} : vector<8x129xbf16> to vector<8x128xbf16>
    %c0_1 = arith.constant 0 : index
    %c0_2 = arith.constant 0 : index
    %c0_3 = arith.constant 0 : index
    %6 = vector.load %arg3[%c0_1, %c0_2, %c0_3] : memref<2x9x8xbf16, #tpu.memory_space<vmem>>, vector<1x9x8xbf16>
    %7 = vector.shape_cast %6 : vector<1x9x8xbf16> to vector<9x8xbf16>
    %cst = arith.constant dense<0.000000e+00> : vector<9x128xf32>
    %8 = tpu.matmul %7, %5, %cst {dimension_numbers = #tpu.dot_dimension_numbers<[1], [0], [0], [1], [0, 0, 1, 1], [], []>} : vector<9x8xbf16>, vector<8x128xbf16>, vector<9x128xf32> -> vector<9x128xf32>
    %c0_4 = arith.constant 0 : index
    %c0_5 = arith.constant 0 : index
    %c0_6 = arith.constant 0 : index
    %9 = vector.load %arg4[%c0_4, %c0_5, %c0_6] : memref<2x9x8xbf16, #tpu.memory_space<vmem>>, vector<1x9x8xbf16>
    %10 = vector.shape_cast %9 : vector<1x9x8xbf16> to vector<9x8xbf16>
    %cst_7 = arith.constant dense<0.000000e+00> : vector<9x128xf32>
    %11 = tpu.matmul %10, %5, %cst_7 {dimension_numbers = #tpu.dot_dimension_numbers<[1], [0], [0], [1], [0, 0, 1, 1], [], []>} : vector<9x8xbf16>, vector<8x128xbf16>, vector<9x128xf32> -> vector<9x128xf32>
    %12 = vector.extract_strided_slice %4 {offsets = [0, 1], sizes = [8, 128], strides = [1, 1]} : vector<8x129xbf16> to vector<8x128xbf16>
    %c1 = arith.constant 1 : index
    %c0_8 = arith.constant 0 : index
    %c0_9 = arith.constant 0 : index
    %13 = vector.load %arg3[%c1, %c0_8, %c0_9] : memref<2x9x8xbf16, #tpu.memory_space<vmem>>, vector<1x9x8xbf16>
    %14 = vector.shape_cast %13 : vector<1x9x8xbf16> to vector<9x8xbf16>
    %cst_10 = arith.constant dense<0.000000e+00> : vector<9x128xf32>
    %15 = tpu.matmul %14, %12, %cst_10 {dimension_numbers = #tpu.dot_dimension_numbers<[1], [0], [0], [1], [0, 0, 1, 1], [], []>} : vector<9x8xbf16>, vector<8x128xbf16>, vector<9x128xf32> -> vector<9x128xf32>
    %16 = arith.addf %8, %15 : vector<9x128xf32>
    %c1_11 = arith.constant 1 : index
    %c0_12 = arith.constant 0 : index
    %c0_13 = arith.constant 0 : index
    %17 = vector.load %arg4[%c1_11, %c0_12, %c0_13] : memref<2x9x8xbf16, #tpu.memory_space<vmem>>, vector<1x9x8xbf16>
    %18 = vector.shape_cast %17 : vector<1x9x8xbf16> to vector<9x8xbf16>
    %cst_14 = arith.constant dense<0.000000e+00> : vector<9x128xf32>
    %19 = tpu.matmul %18, %12, %cst_14 {dimension_numbers = #tpu.dot_dimension_numbers<[1], [0], [0], [1], [0, 0, 1, 1], [], []>} : vector<9x8xbf16>, vector<8x128xbf16>, vector<9x128xf32> -> vector<9x128xf32>
    %20 = arith.addf %11, %19 : vector<9x128xf32>
    %21 = arith.mulf %16, %16 : vector<9x128xf32>
    %22 = arith.mulf %20, %20 : vector<9x128xf32>
    %23 = arith.addf %21, %22 : vector<9x128xf32>
    %24 = math.sqrt %23 : vector<9x128xf32>
    %c0_15 = arith.constant 0 : index
    %c0_16 = arith.constant 0 : index
    %c0_17 = arith.constant 0 : index
    %25 = vector.load %arg5[%c0_15, %c0_16, %c0_17] : memref<1x9x128xf32, #tpu.memory_space<vmem>>, vector<1x9x128xf32>
    %26 = vector.shape_cast %25 : vector<1x9x128xf32> to vector<9x128xf32>
    %27 = vector.shape_cast %24 : vector<9x128xf32> to vector<1x9x128xf32>
    tpu.vector_store %arg5[%c0_15, %c0_16, %c0_17], %27 {strides = array<i32>} : memref<1x9x128xf32, #tpu.memory_space<vmem>>, vector<1x9x128xf32>,
    %28 = math.atan2 %20, %16 : vector<9x128xf32>
    %c0_18 = arith.constant 0 : index
    %c0_19 = arith.constant 0 : index
    %c0_20 = arith.constant 0 : index
    %29 = vector.load %arg6[%c0_18, %c0_19, %c0_20] : memref<1x9x128xf32, #tpu.memory_space<vmem>>, vector<1x9x128xf32>
    %30 = vector.shape_cast %29 : vector<1x9x128xf32> to vector<9x128xf32>
    %31 = vector.shape_cast %28 : vector<9x128xf32> to vector<1x9x128xf32>
    tpu.vector_store %arg6[%c0_18, %c0_19, %c0_20], %31 {strides = array<i32>} : memref<1x9x128xf32, #tpu.memory_space<vmem>>, vector<1x9x128xf32>,
    return
  }
  func.func @transform_0(%arg0: i32, %arg1: i32) -> (i32, i32, i32) {
    %c0_i32 = arith.constant 0 : i32
    %c0_i32_0 = arith.constant 0 : i32
    %c0_i32_1 = arith.constant 0 : i32
    return %arg0, %c0_i32, %c0_i32_0 : i32, i32, i32
  }
  func.func @transform_1(%arg0: i32, %arg1: i32) -> (i32, i32, i32) {
    %c0_i32 = arith.constant 0 : i32
    %c0_i32_0 = arith.constant 0 : i32
    %c0_i32_1 = arith.constant 0 : i32
    %c0_i32_2 = arith.constant 0 : i32
    return %c0_i32, %c0_i32_0, %c0_i32_1 : i32, i32, i32
  }
  func.func @transform_2(%arg0: i32, %arg1: i32) -> (i32, i32, i32) {
    %c0_i32 = arith.constant 0 : i32
    %c0_i32_0 = arith.constant 0 : i32
    %c0_i32_1 = arith.constant 0 : i32
    %c0_i32_2 = arith.constant 0 : i32
    return %c0_i32, %c0_i32_0, %c0_i32_1 : i32, i32, i32
  }
  func.func @transform_3(%arg0: i32, %arg1: i32) -> (i32, i32, i32) {
    %c0_i32 = arith.constant 0 : i32
    %c0_i32_0 = arith.constant 0 : i32
    return %arg0, %c0_i32, %arg1 : i32, i32, i32
  }
  func.func @transform_4(%arg0: i32, %arg1: i32) -> (i32, i32, i32) {
    %c0_i32 = arith.constant 0 : i32
    %c0_i32_0 = arith.constant 0 : i32
    return %arg0, %c0_i32, %arg1 : i32, i32, i32
  }
}

</mosaic_0001>

<llo_original>
// kernel: tpu_custom_call.1
$region0: #{tpu_custom_call.1}
  #allocation0 [shape = 'u32[]', space=smem, size = 0x4, offset = 0x4, fixed_abs, tag = 'smem constant byte address 0x4 - core index']
  #allocation1 [shape = 'u32[144,128]{1,0:T(1,128)}', space=vmem, size = 0x12000, scoped, tag = 'internal scratch']
  %s0 = inlined_call_operand.vmem [shape: bf16[2,8,256], index: 0, kind: input, shape index: {}]
  %s1 = inlined_call_operand.vmem [shape: bf16[2,9,8], index: 1, kind: input, shape index: {}]
  %s2 = inlined_call_operand.vmem [shape: bf16[2,9,8], index: 2, kind: input, shape index: {}]
  %s3 = inlined_call_operand.vmem [shape: f32[2,9,128], index: 3, kind: output, shape index: {0}]
  %s4 = inlined_call_operand.vmem [shape: f32[2,9,128], index: 4, kind: output, shape index: {1}]
  %5 = xla_tuple %s3, %s4
  %s6 = sld [smem:[#allocation0]]
  $region53: #{tpu_custom_call.1} parent=0
    _
  %s8 = ssub.s32 1, %s6
  %s9 = scalar_select 0, %s8, %s6
  loop: start=0, step=1, limit=4
  $region2: #{tpu_custom_call.1} parent=0 // loop_pre_header
    _
  $region3: #{tpu_custom_call.1} parent=0 // loop_header
    %s11 = sphi 0, %s15
    %p12 = scmp.ge.s32.totalorder %s11, 4
    %s18 = sphi 0, %s30
    %s19 = sphi 0, %s26
    %s20 = sphi 0, %s18
    %s21 = sphi 0, %s19
    %s22 = sphi 0, %s20
    %s23 = sphi 0, %s21
    %s33 = sphi 0, %s35
    %s36 = sphi 0, %s33
    %s37 = sphi 0, %s36
    %s53 = sphi 0, %s37
    %s57 = sphi 0, %s57
    %s59 = sphi 0, %s57
    %s60 = sphi 0, %s59
    %s74 = sphi 0, %s60
    %s78 = sphi 0, %s78
    %s80 = sphi 0, %s78
    %s81 = sphi 0, %s80
    %s95 = sphi 0, %s81
    %s103 = sphi 0, %s105
    %s106 = sphi 0, %s103
    %s107 = sphi 0, %s106
    %s123 = sphi 0, %s107
    %s131 = sphi 0, %s133
    %s134 = sphi 0, %s131
    %s135 = sphi 0, %s134
    %s151 = sphi 0, %s135
  $region4: #{tpu_custom_call.1} parent=0 // loop_header_branch
    %14 = sbr.rel (%p12) target = $region8
  $region5: #{tpu_custom_call.1} parent=0 // loop_body
    %s16 = ssub.s32 %s11, 1
    %s17 = ssub.s32 %s11, 2
    %s24 = sadd.s32 1, %s19
    %p25 = scmp.ge.s32.totalorder %s24, 1
    %s26 = scalar_select %p25, 0, %s24
    %s27 = sadd.s32 1, %s18
    %s28 = scalar_select %p25, %s27, %s18
    %p29 = scmp.ge.s32.totalorder %s28, 2
    %s30 = scalar_select %p29, 0, %s28
    %s31 = ssub.s32 %s18, %s30
    %p32 = scmp.eq.s32.totalorder %s31, 0
    %s34 = sadd.s32 %s33, 1
    %s35 = scalar_select %p32, %s33, %s34
    %p38 = pneg %p32
    %p39 = scmp.eq.s32.totalorder %s11, 1
    %p40 = por %p38, %p39
    %p41 = scmp.ne.s32.totalorder %s33, %s36
    %p42 = scmp.eq.s32.totalorder %s11, 0
    %p43 = por %p41, %p42
    %p44 = scmp.ne.s32.totalorder %s33, %s36
    %p45 = scmp.eq.s32.totalorder %s16, 1
    %p46 = por %p44, %p45
    %p47 = scmp.ne.s32.totalorder %s36, %s37
    %p48 = scmp.eq.s32.totalorder %s16, 0
    %p49 = por %p47, %p48
    %p50 = scmp.ne.s32.totalorder %s36, %s37
    %p51 = scmp.eq.s32.totalorder %s17, 1
    %p52 = por %p50, %p51
    %p54 = scmp.ne.s32.totalorder %s37, %s53
    %p55 = scmp.eq.s32.totalorder %s17, 0
    %p56 = por %p54, %p55
    %s58 = sadd.s32 %s57, 1
    %p61 = scmp.eq.s32.totalorder %s11, 1
    %p62 = scmp.ne.s32.totalorder %s57, %s59
    %p63 = scmp.eq.s32.totalorder %s11, 0
    %p64 = por %p62, %p63
    %p65 = scmp.ne.s32.totalorder %s57, %s59
    %p66 = scmp.eq.s32.totalorder %s16, 1
    %p67 = por %p65, %p66
    %p68 = scmp.ne.s32.totalorder %s59, %s60
    %p69 = scmp.eq.s32.totalorder %s16, 0
    %p70 = por %p68, %p69
    %p71 = scmp.ne.s32.totalorder %s59, %s60
    %p72 = scmp.eq.s32.totalorder %s17, 1
    %p73 = por %p71, %p72
    %p75 = scmp.ne.s32.totalorder %s60, %s74
    %p76 = scmp.eq.s32.totalorder %s17, 0
    %p77 = por %p75, %p76
    %s79 = sadd.s32 %s78, 1
    %p82 = scmp.eq.s32.totalorder %s11, 1
    %p83 = scmp.ne.s32.totalorder %s78, %s80
    %p84 = scmp.eq.s32.totalorder %s11, 0
    %p85 = por %p83, %p84
    %p86 = scmp.ne.s32.totalorder %s78, %s80
    %p87 = scmp.eq.s32.totalorder %s16, 1
    %p88 = por %p86, %p87
    %p89 = scmp.ne.s32.totalorder %s80, %s81
    %p90 = scmp.eq.s32.totalorder %s16, 0
    %p91 = por %p89, %p90
    %p92 = scmp.ne.s32.totalorder %s80, %s81
    %p93 = scmp.eq.s32.totalorder %s17, 1
    %p94 = por %p92, %p93
    %p96 = scmp.ne.s32.totalorder %s81, %s95
    %p97 = scmp.eq.s32.totalorder %s17, 0
    %p98 = por %p96, %p97
    %s99 = ssub.s32 %s18, %s30
    %s100 = ssub.s32 %s19, %s26
    %s101 = sor.u32 %s99, %s100
    %p102 = scmp.eq.s32.totalorder %s101, 0
    %s104 = sadd.s32 %s103, 1
    %s105 = scalar_select %p102, %s103, %s104
    %p108 = pneg %p102
    %p109 = scmp.eq.s32.totalorder %s11, 1
    %p110 = por %p108, %p109
    %p111 = scmp.ne.s32.totalorder %s103, %s106
    %p112 = scmp.eq.s32.totalorder %s11, 0
    %p113 = por %p111, %p112
    %p114 = scmp.ne.s32.totalorder %s103, %s106
    %p115 = scmp.eq.s32.totalorder %s16, 1
    %p116 = por %p114, %p115
    %p117 = scmp.ne.s32.totalorder %s106, %s107
    %p118 = scmp.eq.s32.totalorder %s16, 0
    %p119 = por %p117, %p118
    %p120 = scmp.ne.s32.totalorder %s106, %s107
    %p121 = scmp.eq.s32.totalorder %s17, 1
    %p122 = por %p120, %p121
    %p124 = scmp.ne.s32.totalorder %s107, %s123
    %p125 = scmp.eq.s32.totalorder %s17, 0
    %p126 = por %p124, %p125
    %s127 = ssub.s32 %s18, %s30
    %s128 = ssub.s32 %s19, %s26
    %s129 = sor.u32 %s127, %s128
    %p130 = scmp.eq.s32.totalorder %s129, 0
    %s132 = sadd.s32 %s131, 1
    %s133 = scalar_select %p130, %s131, %s132
    %p136 = pneg %p130
    %p137 = scmp.eq.s32.totalorder %s11, 1
    %p138 = por %p136, %p137
    %p139 = scmp.ne.s32.totalorder %s131, %s134
    %p140 = scmp.eq.s32.totalorder %s11, 0
    %p141 = por %p139, %p140
    %p142 = scmp.ne.s32.totalorder %s131, %s134
    %p143 = scmp.eq.s32.totalorder %s16, 1
    %p144 = por %p142, %p143
    %p145 = scmp.ne.s32.totalorder %s134, %s135
    %p146 = scmp.eq.s32.totalorder %s16, 0
    %p147 = por %p145, %p146
    %p148 = scmp.ne.s32.totalorder %s134, %s135
    %p149 = scmp.eq.s32.totalorder %s17, 1
    %p150 = por %p148, %p149
    %p152 = scmp.ne.s32.totalorder %s135, %s151
    %p153 = scmp.eq.s32.totalorder %s17, 0
    %p154 = por %p152, %p153
    %p155 = scmp.le.s32.totalorder 1, %s11
    %p156 = scmp.lt.s32.totalorder %s11, 3
    %p157 = pnand %p155, %p156
    %p158 = pneg %p157
    // Predicated region
    $region9: #{tpu_custom_call.1} parent=5 // pred_check
      _
    $region10: #{tpu_custom_call.1} parent=5 // pred_check_branch
      %160 = sbr.rel (%p157) target = $region12
    $region11: #{tpu_custom_call.1} parent=5 // pred_region
      %s161 = ssub.s32 %s11, 1
      // Predicated region
      $region13: #{tpu_custom_call.1} parent=11 // pred_check
        %p162 = pneg %p70
      $region14: #{tpu_custom_call.1} parent=11 // pred_check_branch
        %164 = sbr.rel (%p162) target = $region16
      $region15: #{tpu_custom_call.1} parent=11 // pred_region
        _
      $region16: #{tpu_custom_call.1} parent=11 // pred_fallthru
        _
      // Predicated region
      $region17: #{tpu_custom_call.1} parent=11 // pred_check
        %p165 = pneg %p91
      $region18: #{tpu_custom_call.1} parent=11 // pred_check_branch
        %167 = sbr.rel (%p165) target = $region20
      $region19: #{tpu_custom_call.1} parent=11 // pred_region
        _
      $region20: #{tpu_custom_call.1} parent=11 // pred_fallthru
        _
    $region12: #{tpu_custom_call.1} parent=5 // pred_fallthru
      _
    %p168 = scmp.lt.s32.totalorder %s11, 2
    // Predicated region
    $region21: #{tpu_custom_call.1} parent=5 // pred_check
      %p169 = pneg %p168
    $region22: #{tpu_custom_call.1} parent=5 // pred_check_branch
      %171 = sbr.rel (%p169) target = $region24
    $region23: #{tpu_custom_call.1} parent=5 // pred_region
      // Predicated region
      $region25: #{tpu_custom_call.1} parent=23 // pred_check
        %p172 = pneg %p43
      $region26: #{tpu_custom_call.1} parent=23 // pred_check_branch
        %174 = sbr.rel (%p172) target = $region28
      $region27: #{tpu_custom_call.1} parent=23 // pred_region
        %p175 = scmp.lt.s32.totalorder %s18, 1
        %s176 = scalar_select %p175, %s18, 1
        %s177 = smul.addr %s176, 2
        %s178 = smul.addr %s177, 4
        %s179 = scalar_lea.vmem %s0, %s178
      $region28: #{tpu_custom_call.1} parent=23 // pred_fallthru
        _
    $region24: #{tpu_custom_call.1} parent=5 // pred_fallthru
      _
    %p180 = scmp.le.s32.totalorder 1, %s11
    %p181 = scmp.lt.s32.totalorder %s11, 3
    %p182 = pnand %p180, %p181
    %p183 = pneg %p182
    // Predicated region
    $region29: #{tpu_custom_call.1} parent=5 // pred_check
      _
    $region30: #{tpu_custom_call.1} parent=5 // pred_check_branch
      %185 = sbr.rel (%p182) target = $region32
    $region31: #{tpu_custom_call.1} parent=5 // pred_region
      %s186 = ssub.s32 %s11, 1
      %p187 = scmp.lt.s32.totalorder %s20, 1
      %s188 = scalar_select %p187, %s20, 1
      %s189 = smul.addr %s188, 2
      %s190 = smul.addr %s189, 4
      %s191 = scalar_lea.vmem %s0, %s190
      %p192 = pneg %p49
      %p193 = pneg %p46
      %p194 = pneg %p70
      %p195 = pneg %p67
      %p196 = pneg %p91
      %p197 = pneg %p88
      %p198 = pneg %p119
      %p199 = pneg %p116
      %p200 = scmp.lt.s32.totalorder %s20, 1
      %s201 = scalar_select %p200, %s20, 1
      %p202 = scmp.lt.s32.totalorder %s21, 0
      %s203 = scalar_select %p202, %s21, 0
      %s204 = smul.addr %s201, 2
      %s205 = sadd.s32 %s203, %s204
      %s206 = smul.addr %s205, 8
      %s207 = scalar_lea.vmem %s3, %s206
      %p208 = pneg %p147
      %p209 = pneg %p144
      %p210 = scmp.lt.s32.totalorder %s20, 1
      %s211 = scalar_select %p210, %s20, 1
      %p212 = scmp.lt.s32.totalorder %s21, 0
      %s213 = scalar_select %p212, %s21, 0
      %s214 = smul.addr %s211, 2
      %s215 = sadd.s32 %s213, %s214
      %s216 = smul.addr %s215, 8
      %s217 = scalar_lea.vmem %s4, %s216
      %p218 = scmp.lt.s32.totalorder %s20, 1
      %s219 = scalar_select %p218, %s20, 1
      %s220 = smul.addr %s219, 2
      %s221 = smul.addr %s220, 4
      %s222 = scalar_lea.vmem %s0, %s221
      %p223 = scmp.lt.s32.totalorder %s20, 1
      %s224 = scalar_select %p223, %s20, 1
      %p225 = scmp.lt.s32.totalorder %s21, 0
      %s226 = scalar_select %p225, %s21, 0
      %s227 = smul.addr %s224, 2
      %s228 = sadd.s32 %s226, %s227
      %s229 = smul.addr %s228, 8
      %s230 = scalar_lea.vmem %s3, %s229
      %p231 = scmp.lt.s32.totalorder %s20, 1
      %s232 = scalar_select %p231, %s20, 1
      %p233 = scmp.lt.s32.totalorder %s21, 0
      %s234 = scalar_select %p233, %s21, 0
      %s235 = smul.addr %s232, 2
      %s236 = sadd.s32 %s234, %s235
      %s237 = smul.addr %s236, 8
      %s238 = scalar_lea.vmem %s4, %s237
      %s240 = smul.u32 %s21, 128
      %s241 = sshra.s32 %s240, 7
      %s242 = sand.u32 %s240, 127
      %s243 = smul.addr %s241, 4
      %s244 = scalar_lea.vmem %s222, %s243
      %v245 = vld [vmem:[%s244] sm:$0xff]
      %v246 = vld [vmem:[%s1] sm:$0xf]
      %v247 = vld [vmem:[%s1 + $0x4] sm:$0x1]
      %v248 = vld [vmem:[%s2] sm:$0xf]
      %v249 = vld [vmem:[%s2 + $0x4] sm:$0x1]
      %s250 = scalar_lea.vmem %s1, 8
      %v251 = vld [vmem:[%s250] sm:$0xf]
      %v252 = vld [vmem:[%s250 + $0x4] sm:$0x1]
      %v255 = vunpack.c.l.b16 %v251
      %v256 = vunpack.c.l.b16 %v252
      %v257 = vpack.c.b16 %v256, %v255
      %v259 = vunpack.c.l.b16 %v245
      %v260 = vunpack.c.h.b16 %v245
      %v261 = vpack.c.b16 %v259, %v259
      %v262 = vpack.c.b16 %v260, %v260
      %263 = vrot.lane.b32.xlu0 %v261, 127
      %v264 = vpop.permute.xlu0 %263
      %265 = vrot.lane.b32.xlu0 %v262, 127
      %v266 = vpop.permute.xlu0 %265
      %vm267 = vcmask 1039360
      %v268 = vsel %vm267, %v264, %v266
      %vm269 = vcmask 64512
      %v271 = vsel %vm269, %v257, 0
      %vm273 = vcmask 1043456
      %v275 = vsel %vm273, %v268, 0
      %277 = vmatprep.subr.bf16.mxu0 0
      %278 = vmatpush1.bf16.msra.mxu0 %v275
      %279 = vmatprep.subr.bf16.mxu0 0
      %280 = vmatpush1.bf16.msra.mxu0 0
      %281 = vmatprep.subr.bf16.mxu0 0
      %282 = vmatpush1.bf16.msra.mxu0 0
      %283 = vmatprep.subr.bf16.mxu0 0
      %284 = vmatpush1.bf16.msra.mxu0 0
      %285 = vmatprep.subr.bf16.mxu0 0
      %286 = vmatpush1.bf16.msra.mxu0 0
      %287 = vmatprep.subr.bf16.mxu0 0
      %288 = vmatpush1.bf16.msra.mxu0 0
      %289 = vmatprep.subr.bf16.mxu0 0
      %290 = vmatpush1.bf16.msra.mxu0 0
      %291 = vmatprep.subr.bf16.mxu0 0
      %292 = vmatpush1.bf16.msra.mxu0 0
      %293 = vmatprep.subr.bf16.mxu0 0
      %294 = vmatpush1.bf16.msra.mxu0 0
      %295 = vmatprep.subr.bf16.mxu0 0
      %296 = vmatpush1.bf16.msra.mxu0 0
      %297 = vmatprep.subr.bf16.mxu0 0
      %298 = vmatpush1.bf16.msra.mxu0 0
      %299 = vmatprep.subr.bf16.mxu0 0
      %300 = vmatpush1.bf16.msra.mxu0 0
      %301 = vmatprep.subr.bf16.mxu0 0
      %302 = vmatpush1.bf16.msra.mxu0 0
      %303 = vmatprep.subr.bf16.mxu0 0
      %304 = vmatpush1.bf16.msra.mxu0 0
      %305 = vmatprep.subr.bf16.mxu0 0
      %306 = vmatpush1.bf16.msra.mxu0 0
      %307 = vmatprep.subr.bf16.mxu0 0
      %308 = vmatpush1.bf16.msra.mxu0 0
      %309 = vmatprep.mubr.bf16.mxu0 0
      %310 = vmatmul.mubr.bf16.gmra.mrb[0].mxu0 %v271
      %v311 = vpop.f32.mrb[0].mxu0
      %v312 = vadd.f32 0.0, %v311
      %v313 = vpop.f32.mrb[0].mxu0
      %v314 = vpop.f32.mrb[0].mxu0
      %v315 = vadd.f32 0.0, %v314
      %v316 = vpop.f32.mrb[0].mxu0
      %317 = vdwg.mxu0
      %v320 = vunpack.c.l.b16 %v246
      %v321 = vunpack.c.l.b16 %v247
      %v322 = vpack.c.b16 %v321, %v320
      %v324 = vsel %vm269, %v322, 0
      %v327 = vsel %vm273, %v245, 0
      %329 = vmatprep.subr.bf16.mxu0 0
      %330 = vmatpush1.bf16.msra.mxu0 %v327
      %331 = vmatprep.subr.bf16.mxu0 0
      %332 = vmatpush1.bf16.msra.mxu0 0
      %333 = vmatprep.subr.bf16.mxu0 0
      %334 = vmatpush1.bf16.msra.mxu0 0
      %335 = vmatprep.subr.bf16.mxu0 0
      %336 = vmatpush1.bf16.msra.mxu0 0
      %337 = vmatprep.subr.bf16.mxu0 0
      %338 = vmatpush1.bf16.msra.mxu0 0
      %339 = vmatprep.subr.bf16.mxu0 0
      %340 = vmatpush1.bf16.msra.mxu0 0
      %341 = vmatprep.subr.bf16.mxu0 0
      %342 = vmatpush1.bf16.msra.mxu0 0
      %343 = vmatprep.subr.bf16.mxu0 0
      %344 = vmatpush1.bf16.msra.mxu0 0
      %345 = vmatprep.subr.bf16.mxu0 0
      %346 = vmatpush1.bf16.msra.mxu0 0
      %347 = vmatprep.subr.bf16.mxu0 0
      %348 = vmatpush1.bf16.msra.mxu0 0
      %349 = vmatprep.subr.bf16.mxu0 0
      %350 = vmatpush1.bf16.msra.mxu0 0
      %351 = vmatprep.subr.bf16.mxu0 0
      %352 = vmatpush1.bf16.msra.mxu0 0
      %353 = vmatprep.subr.bf16.mxu0 0
      %354 = vmatpush1.bf16.msra.mxu0 0
      %355 = vmatprep.subr.bf16.mxu0 0
      %356 = vmatpush1.bf16.msra.mxu0 0
      %357 = vmatprep.subr.bf16.mxu0 0
      %358 = vmatpush1.bf16.msra.mxu0 0
      %359 = vmatprep.subr.bf16.mxu0 0
      %360 = vmatpush1.bf16.msra.mxu0 0
      %361 = vmatprep.mubr.bf16.mxu0 0
      %362 = vmatmul.mubr.bf16.gmra.mrb[0].mxu0 %v324
      %v363 = vpop.f32.mrb[0].mxu0
      %v364 = vadd.f32 %v312, %v363
      %v365 = vpop.f32.mrb[0].mxu0
      %v366 = vpop.f32.mrb[0].mxu0
      %v367 = vadd.f32 %v315, %v366
      %v368 = vpop.f32.mrb[0].mxu0
      %369 = vdwg.mxu0
      %s370 = scalar_lea.vmem %s2, 8
      %v371 = vld [vmem:[%s370] sm:$0xf]
      %v372 = vld [vmem:[%s370 + $0x4] sm:$0x1]
      %v375 = vunpack.c.l.b16 %v371
      %v376 = vunpack.c.l.b16 %v372
      %v377 = vpack.c.b16 %v376, %v375
      %v379 = vsel %vm269, %v377, 0
      %381 = vmatprep.subr.bf16.mxu0 0
      %382 = vmatpush1.bf16.msra.mxu0 %v275
      %383 = vmatprep.subr.bf16.mxu0 0
      %384 = vmatpush1.bf16.msra.mxu0 0
      %385 = vmatprep.subr.bf16.mxu0 0
      %386 = vmatpush1.bf16.msra.mxu0 0
      %387 = vmatprep.subr.bf16.mxu0 0
      %388 = vmatpush1.bf16.msra.mxu0 0
      %389 = vmatprep.subr.bf16.mxu0 0
      %390 = vmatpush1.bf16.msra.mxu0 0
      %391 = vmatprep.subr.bf16.mxu0 0
      %392 = vmatpush1.bf16.msra.mxu0 0
      %393 = vmatprep.subr.bf16.mxu0 0
      %394 = vmatpush1.bf16.msra.mxu0 0
      %395 = vmatprep.subr.bf16.mxu0 0
      %396 = vmatpush1.bf16.msra.mxu0 0
      %397 = vmatprep.subr.bf16.mxu0 0
      %398 = vmatpush1.bf16.msra.mxu0 0
      %399 = vmatprep.subr.bf16.mxu0 0
      %400 = vmatpush1.bf16.msra.mxu0 0
      %401 = vmatprep.subr.bf16.mxu0 0
      %402 = vmatpush1.bf16.msra.mxu0 0
      %403 = vmatprep.subr.bf16.mxu0 0
      %404 = vmatpush1.bf16.msra.mxu0 0
      %405 = vmatprep.subr.bf16.mxu0 0
      %406 = vmatpush1.bf16.msra.mxu0 0
      %407 = vmatprep.subr.bf16.mxu0 0
      %408 = vmatpush1.bf16.msra.mxu0 0
      %409 = vmatprep.subr.bf16.mxu0 0
      %410 = vmatpush1.bf16.msra.mxu0 0
      %411 = vmatprep.subr.bf16.mxu0 0
      %412 = vmatpush1.bf16.msra.mxu0 0
      %413 = vmatprep.mubr.bf16.mxu0 0
      %414 = vmatmul.mubr.bf16.gmra.mrb[0].mxu0 %v379
      %v415 = vpop.f32.mrb[0].mxu0
      %v416 = vadd.f32 0.0, %v415
      %v417 = vpop.f32.mrb[0].mxu0
      %v418 = vpop.f32.mrb[0].mxu0
      %v419 = vadd.f32 0.0, %v418
      %v420 = vpop.f32.mrb[0].mxu0
      %421 = vdwg.mxu0
      %v424 = vunpack.c.l.b16 %v248
      %v425 = vunpack.c.l.b16 %v249
      %v426 = vpack.c.b16 %v425, %v424
      %v428 = vsel %vm269, %v426, 0
      %430 = vmatprep.subr.bf16.mxu0 0
      %431 = vmatpush1.bf16.msra.mxu0 %v327
      %432 = vmatprep.subr.bf16.mxu0 0
      %433 = vmatpush1.bf16.msra.mxu0 0
      %434 = vmatprep.subr.bf16.mxu0 0
      %435 = vmatpush1.bf16.msra.mxu0 0
      %436 = vmatprep.subr.bf16.mxu0 0
      %437 = vmatpush1.bf16.msra.mxu0 0
      %438 = vmatprep.subr.bf16.mxu0 0
      %439 = vmatpush1.bf16.msra.mxu0 0
      %440 = vmatprep.subr.bf16.mxu0 0
      %441 = vmatpush1.bf16.msra.mxu0 0
      %442 = vmatprep.subr.bf16.mxu0 0
      %443 = vmatpush1.bf16.msra.mxu0 0
      %444 = vmatprep.subr.bf16.mxu0 0
      %445 = vmatpush1.bf16.msra.mxu0 0
      %446 = vmatprep.subr.bf16.mxu0 0
      %447 = vmatpush1.bf16.msra.mxu0 0
      %448 = vmatprep.subr.bf16.mxu0 0
      %449 = vmatpush1.bf16.msra.mxu0 0
      %450 = vmatprep.subr.bf16.mxu0 0
      %451 = vmatpush1.bf16.msra.mxu0 0
      %452 = vmatprep.subr.bf16.mxu0 0
      %453 = vmatpush1.bf16.msra.mxu0 0
      %454 = vmatprep.subr.bf16.mxu0 0
      %455 = vmatpush1.bf16.msra.mxu0 0
      %456 = vmatprep.subr.bf16.mxu0 0
      %457 = vmatpush1.bf16.msra.mxu0 0
      %458 = vmatprep.subr.bf16.mxu0 0
      %459 = vmatpush1.bf16.msra.mxu0 0
      %460 = vmatprep.subr.bf16.mxu0 0
      %461 = vmatpush1.bf16.msra.mxu0 0
      %462 = vmatprep.mubr.bf16.mxu0 0
      %463 = vmatmul.mubr.bf16.gmra.mrb[0].mxu0 %v428
      %v464 = vpop.f32.mrb[0].mxu0
      %v465 = vadd.f32 %v416, %v464
      %v466 = vpop.f32.mrb[0].mxu0
      %v467 = vpop.f32.mrb[0].mxu0
      %v468 = vadd.f32 %v419, %v467
      %v469 = vpop.f32.mrb[0].mxu0
      %470 = vdwg.mxu0
      %v471 = vmul.f32 %v364, %v364
      %v472 = vmul.f32 %v367, %v367
      %v473 = vmul.f32 %v465, %v465
      %v474 = vmul.f32 %v468, %v468
      %v475 = vadd.f32 %v471, %v473
      %v476 = vadd.f32 %v472, %v474
      %v477 = vrsqrt.pop %v475
      %v478 = vmul.f32 %v475, %v477
      %vm479 = vcmp.eq.f32.partialorder %v475, inf
      %v480 = vsel %vm479, %v475, %v478
      %vm481 = vcmp.eq.f32.partialorder %v475, 0.0
      %v482 = vand.u32 %v475, 2147483648
      %v483 = vsel %vm481, %v482, %v480
      %v484 = vrsqrt.pop %v476
      %v485 = vmul.f32 %v476, %v484
      %vm486 = vcmp.eq.f32.partialorder %v476, inf
      %v487 = vsel %vm486, %v476, %v485
      %vm488 = vcmp.eq.f32.partialorder %v476, 0.0
      %v489 = vand.u32 %v476, 2147483648
      %v490 = vsel %vm488, %v489, %v487
      %491 = vst [vmem:[%s230] sm:$0xff] %v483
      %492 = vst [vmem:[%s230 + $0x8] sm:$0x1] %v490
      %v493 = vand.u32 2147483647, %v364
      %v494 = vand.u32 2147483647, %v465
      %v495 = vmin.f32 %v493, %v494
      %v496 = vmax.f32 %v493, %v494
      %v497 = vrcp.pop %v496
      %v498 = vmul.f32 %v495, %v497
      %v499 = vmul.f32 %v498, %v498
      %v500 = vmul.f32 0.002785687, %v499
      %v501 = vadd.f32 %v500, -0.015866
      %v502 = vmul.f32 %v501, %v499
      %v503 = vadd.f32 %v502, 0.04247222
      %v504 = vmul.f32 %v503, %v499
      %v505 = vadd.f32 %v504, -0.074975304
      %v506 = vmul.f32 %v505, %v499
      %v507 = vadd.f32 %v506, 0.1064488
      %v508 = vmul.f32 %v507, %v499
      %v509 = vadd.f32 %v508, -0.14207031
      %v510 = vmul.f32 %v509, %v499
      %v511 = vadd.f32 %v510, 0.19993454
      %v512 = vmul.f32 %v511, %v499
      %v513 = vadd.f32 %v512, -0.33333147
      %v514 = vmul.f32 %v513, %v499
      %v515 = vmul.f32 %v514, %v498
      %v516 = vadd.f32 %v515, %v498
      %vm517 = vcmp.gt.f32.partialorder %v494, %v493
      %v518 = vsub.f32 1.5707964, %v516
      %v519 = vsel %vm517, %v518, %v516
      %vm520 = vcmp.lt.f32.partialorder %v364, 0.0
      %v521 = vsub.f32 3.1415927, %v519
      %v522 = vsel %vm520, %v521, %v519
      %vm523 = vcmp.lt.s32.totalorder %v364, 0
      %v524 = vsel %vm523, 3.1415927, 0.0
      %vm525 = vcmp.eq.f32.partialorder %v465, 0.0
      %v526 = vsel %vm525, %v524, %v522
      %vm527 = vcmp.ne.f32.partialorder %v364, %v364
      %vm528 = vcmp.ne.f32.partialorder %v465, %v465
      %vm529 = vmor %vm527, %vm528
      %v530 = vsel %vm529, nan, %v526
      %vm531 = vcmp.lt.f32.partialorder %v364, 0.0
      %v532 = vsel %vm531, 2.3561945, 0.7853982
      %vm533 = vcmp.eq.s32.totalorder %v493, inf
      %vm534 = vcmp.eq.s32.totalorder %v494, inf
      %vm535 = vmand %vm533, %vm534
      %v536 = vsel %vm535, %v532, %v530
      %v537 = vand.u32 2147483647, %v536
      %v538 = vand.u32 %v465, 2147483648
      %v539 = vor.u32 %v537, %v538
      %v540 = vand.u32 2147483647, %v367
      %v541 = vand.u32 2147483647, %v468
      %v542 = vmin.f32 %v540, %v541
      %v543 = vmax.f32 %v540, %v541
      %v544 = vrcp.pop %v543
      %v545 = vmul.f32 %v542, %v544
      %v546 = vmul.f32 %v545, %v545
      %v547 = vmul.f32 0.002785687, %v546
      %v548 = vadd.f32 %v547, -0.015866
      %v549 = vmul.f32 %v548, %v546
      %v550 = vadd.f32 %v549, 0.04247222
      %v551 = vmul.f32 %v550, %v546
      %v552 = vadd.f32 %v551, -0.074975304
      %v553 = vmul.f32 %v552, %v546
      %v554 = vadd.f32 %v553, 0.1064488
      %v555 = vmul.f32 %v554, %v546
      %v556 = vadd.f32 %v555, -0.14207031
      %v557 = vmul.f32 %v556, %v546
      %v558 = vadd.f32 %v557, 0.19993454
      %v559 = vmul.f32 %v558, %v546
      %v560 = vadd.f32 %v559, -0.33333147
      %v561 = vmul.f32 %v560, %v546
      %v562 = vmul.f32 %v561, %v545
      %v563 = vadd.f32 %v562, %v545
      %vm564 = vcmp.gt.f32.partialorder %v541, %v540
      %v565 = vsub.f32 1.5707964, %v563
      %v566 = vsel %vm564, %v565, %v563
      %vm567 = vcmp.lt.f32.partialorder %v367, 0.0
      %v568 = vsub.f32 3.1415927, %v566
      %v569 = vsel %vm567, %v568, %v566
      %vm570 = vcmp.lt.s32.totalorder %v367, 0
      %v571 = vsel %vm570, 3.1415927, 0.0
      %vm572 = vcmp.eq.f32.partialorder %v468, 0.0
      %v573 = vsel %vm572, %v571, %v569
      %vm574 = vcmp.ne.f32.partialorder %v367, %v367
      %vm575 = vcmp.ne.f32.partialorder %v468, %v468
      %vm576 = vmor %vm574, %vm575
      %v577 = vsel %vm576, nan, %v573
      %vm578 = vcmp.lt.f32.partialorder %v367, 0.0
      %v579 = vsel %vm578, 2.3561945, 0.7853982
      %vm580 = vcmp.eq.s32.totalorder %v540, inf
      %vm581 = vcmp.eq.s32.totalorder %v541, inf
      %vm582 = vmand %vm580, %vm581
      %v583 = vsel %vm582, %v579, %v577
      %v584 = vand.u32 2147483647, %v583
      %v585 = vand.u32 %v468, 2147483648
      %v586 = vor.u32 %v584, %v585
      %587 = vst [vmem:[%s238] sm:$0xff] %v539
      %588 = vst [vmem:[%s238 + $0x8] sm:$0x1] %v586
      %p589 = scmp.lt.s32.totalorder %s20, 1
      %s590 = scalar_select %p589, %s20, 1
      %p591 = scmp.lt.s32.totalorder %s21, 0
      %s592 = scalar_select %p591, %s21, 0
      %s593 = smul.addr %s590, 2
      %s594 = sadd.s32 %s592, %s593
      %s595 = smul.addr %s594, 8
      %s596 = scalar_lea.vmem %s3, %s595
      %p597 = scmp.lt.s32.totalorder %s20, 1
      %s598 = scalar_select %p597, %s20, 1
      %p599 = scmp.lt.s32.totalorder %s21, 0
      %s600 = scalar_select %p599, %s21, 0
      %s601 = smul.addr %s598, 2
      %s602 = sadd.s32 %s600, %s601
      %s603 = smul.addr %s602, 8
      %s604 = scalar_lea.vmem %s4, %s603
      // Predicated region
      $region33: #{tpu_custom_call.1} parent=31 // pred_check
        %p605 = pneg %p116
      $region34: #{tpu_custom_call.1} parent=31 // pred_check_branch
        %607 = sbr.rel (%p605) target = $region36
      $region35: #{tpu_custom_call.1} parent=31 // pred_region
        _
      $region36: #{tpu_custom_call.1} parent=31 // pred_fallthru
        _
      // Predicated region
      $region37: #{tpu_custom_call.1} parent=31 // pred_check
        %p608 = pneg %p144
      $region38: #{tpu_custom_call.1} parent=31 // pred_check_branch
        %610 = sbr.rel (%p608) target = $region40
      $region39: #{tpu_custom_call.1} parent=31 // pred_region
        _
      $region40: #{tpu_custom_call.1} parent=31 // pred_fallthru
        _
    $region32: #{tpu_custom_call.1} parent=5 // pred_fallthru
      _
    %p611 = scmp.le.s32.totalorder 2, %s11
    // Predicated region
    $region41: #{tpu_custom_call.1} parent=5 // pred_check
      %p612 = pneg %p611
    $region42: #{tpu_custom_call.1} parent=5 // pred_check_branch
      %614 = sbr.rel (%p612) target = $region44
    $region43: #{tpu_custom_call.1} parent=5 // pred_region
      %s615 = ssub.s32 %s11, 2
      // Predicated region
      $region45: #{tpu_custom_call.1} parent=43 // pred_check
        %p616 = pneg %p122
      $region46: #{tpu_custom_call.1} parent=43 // pred_check_branch
        %618 = sbr.rel (%p616) target = $region48
      $region47: #{tpu_custom_call.1} parent=43 // pred_region
        %p619 = scmp.lt.s32.totalorder %s22, 1
        %s620 = scalar_select %p619, %s22, 1
        %p621 = scmp.lt.s32.totalorder %s23, 0
        %s622 = scalar_select %p621, %s23, 0
        %s623 = smul.addr %s620, 2
        %s624 = sadd.s32 %s622, %s623
        %s625 = smul.addr %s624, 8
        %s626 = scalar_lea.vmem %s3, %s625
      $region48: #{tpu_custom_call.1} parent=43 // pred_fallthru
        _
      // Predicated region
      $region49: #{tpu_custom_call.1} parent=43 // pred_check
        %p627 = pneg %p150
      $region50: #{tpu_custom_call.1} parent=43 // pred_check_branch
        %629 = sbr.rel (%p627) target = $region52
      $region51: #{tpu_custom_call.1} parent=43 // pred_region
        %p630 = scmp.lt.s32.totalorder %s22, 1
        %s631 = scalar_select %p630, %s22, 1
        %p632 = scmp.lt.s32.totalorder %s23, 0
        %s633 = scalar_select %p632, %s23, 0
        %s634 = smul.addr %s631, 2
        %s635 = sadd.s32 %s633, %s634
        %s636 = smul.addr %s635, 8
        %s637 = scalar_lea.vmem %s4, %s636
      $region52: #{tpu_custom_call.1} parent=43 // pred_fallthru
        _
    $region44: #{tpu_custom_call.1} parent=5 // pred_fallthru
      _
  $region6: #{tpu_custom_call.1} parent=0 // loop_footer
    %s15 = sadd.s32 1, %s11
  $region7: #{tpu_custom_call.1} parent=0 // loop_footer_branch
    %10 = sbr.rel target = $region3
  $region8: #{tpu_custom_call.1} parent=0 // loop_exit
    _

</llo_original>
